<compile_context>
chip_gen: v5e
topology: v5e:2x2
jax: 0.10.0
libtpu: 0.0.40
codegen_flags: <defaults>
</compile_context>

<pallas_src>
import math

import jax
import jax.numpy as jnp
from jax.experimental import pallas as pl
from jax.experimental.pallas import tpu as pltpu


SEG_ROWS_PAD = 8      # segment table rows padded to a sublane multiple
NBUF = 8              # DMA gather ring depth (power of two)


def bert_embedding_kernel(seq_ids_ref,   # SMEM (B*T_pad,) int32  (scalar prefetch)
                          seg_ids_ref,   # VMEM (tTok, 1) int32   (batch dim squeezed)
                          tok_hbm_ref,   # HBM  (V, H_pad)        (pl.ANY, manual DMA)
                          seg_tab_ref,   # VMEM (SEG_ROWS_PAD, H_pad)
                          pe_ref,        # VMEM (tTok, H_pad)
                          out_ref,       # VMEM (tTok, H_pad) f32 (batch dim squeezed)
                          tok_buf_ref,   # VMEM (tTok, H_pad) scratch (table dtype)
                          dma_sems):     # DMA semaphores (NBUF,)
    tTok = out_ref.shape[0]
    nbuf = dma_sems.shape[0]
    b = pl.program_id(0)
    j = pl.program_id(1)
    T_pad = pl.num_programs(1) * tTok
    base = b * T_pad + j * tTok          # offset of this block in flat id array

    def slot(t):
        return t & (nbuf - 1)            # nbuf is a power of two

    def start_row_copy(t):
        row = seq_ids_ref[base + t]      # dynamic SMEM scalar read
        pltpu.make_async_copy(
            tok_hbm_ref.at[pl.ds(row, 1), :],
            tok_buf_ref.at[pl.ds(t, 1), :],
            dma_sems.at[slot(t)],
        ).start()

    def wait_row_copy(t):
        # Source address is irrelevant for the wait; only shape/size matters.
        pltpu.make_async_copy(
            tok_hbm_ref.at[pl.ds(0, 1), :],
            tok_buf_ref.at[pl.ds(t, 1), :],
            dma_sems.at[slot(t)],
        ).wait()

    # Prime the DMA ring (static unroll).
    for t in range(min(nbuf, tTok)):
        start_row_copy(t)

    # Steady state: wait row t, launch row t + nbuf.
    @pl.loop(0, tTok)
    def _(t):
        wait_row_copy(t)

        @pl.when(t + nbuf < tTok)
        def _():
            start_row_copy(t + nbuf)

    # Segment embedding: only 3 real rows -> two VPU selects (no MXU).
    seg_ids = seg_ids_ref[...]                     # (tTok, 1) int32
    row0 = seg_tab_ref[0:1, :]
    row1 = seg_tab_ref[1:2, :]
    row2 = seg_tab_ref[2:3, :]
    seg_emb = jnp.where(seg_ids == 1, row1,
                        jnp.where(seg_ids == 2, row2, row0))   # (tTok, H_pad)

    # token + position + segment, accumulated in f32.
    out_ref[...] = (tok_buf_ref[...].astype(jnp.float32)
                    + pe_ref[...].astype(jnp.float32)
                    + seg_emb.astype(jnp.float32))
    # TODO(synk): nn.Dropout(p=0.1) in training mode is stochastic; eval-mode
    # identity is used here (could add pltpu.prng_seed/prng_random_bits mask).


def make_positional_table(max_len, d_model):
    """Sinusoidal PE identical to the PyTorch PositionalEmbedding buffer."""
    position = jnp.arange(max_len, dtype=jnp.float32)[:, None]          # (L, 1)
    div_term = jnp.exp(jnp.arange(0, d_model, 2, dtype=jnp.float32)
                       * -(math.log(10000.0) / d_model))                # (H/2,)
    pe = jnp.zeros((max_len, d_model), dtype=jnp.float32)
    pe = pe.at[:, 0::2].set(jnp.sin(position * div_term))
    pe = pe.at[:, 1::2].set(jnp.cos(position * div_term))
    return pe                                                           # (L, H)


def _round_up(x, m):
    return ((x + m - 1) // m) * m


@jax.jit
def bert_embedding(sequence, segment_label, tok_table, seg_table, pe_full):
    """
    sequence, segment_label: (B, T) int
    tok_table: (V, H), seg_table: (n_seg, H), pe_full: (max_len, H)
    returns: (B, T, H) float32
    """
    B, T = sequence.shape
    V, H = tok_table.shape
    n_seg = seg_table.shape[0]

    H_pad = _round_up(H, 128)
    tTok = 128 if T >= 128 else _round_up(T, 8)      # seq tile (sublane-dense)
    T_pad = _round_up(T, tTok)
    num_t_blocks = T_pad // tTok

    # Pad tables / PE to a lane-dense hidden dim.  Token table stays in HBM.
    tok_p = jnp.pad(tok_table, ((0, 0), (0, H_pad - H)))
    seg_p = jnp.pad(seg_table, ((0, SEG_ROWS_PAD - n_seg), (0, H_pad - H)))
    pe_p = jnp.pad(pe_full[:T], ((0, T_pad - T), (0, H_pad - H)))        # (T_pad, H_pad)

    # Clamp ids (DMA gather has no OOB check) and pad the sequence axis.
    seq_pad = jnp.pad(jnp.clip(sequence.astype(jnp.int32), 0, V - 1),
                      ((0, 0), (0, T_pad - T)))
    seg_pad = jnp.pad(jnp.clip(segment_label.astype(jnp.int32), 0, n_seg - 1),
                      ((0, 0), (0, T_pad - T)))
    seq_flat = seq_pad.reshape(-1)                   # (B*T_pad,) -> SMEM prefetch
    seg_3d = seg_pad[:, :, None]                     # (B, T_pad, 1)

    tbytes = jnp.dtype(tok_p.dtype).itemsize
    vmem_limit = int(
        2 * tTok * H_pad * 4            # out double buffer (f32)
        + 2 * tTok * H_pad * 4          # positional double buffer
        + tTok * H_pad * tbytes         # gather scratch
        + 2 * SEG_ROWS_PAD * H_pad * 4  # resident segment table
        + 2 * tTok * 4                  # segment-id block
        + (8 << 20))                    # headroom
    vmem_limit = min(max(vmem_limit, 16 << 20), 100 << 20)

    out = pl.pallas_call(
        bert_embedding_kernel,
        out_shape=jax.ShapeDtypeStruct((B, T_pad, H_pad), jnp.float32),
        grid_spec=pltpu.PrefetchScalarGridSpec(
            num_scalar_prefetch=1,                                    # seq ids -> SMEM
            grid=(B, num_t_blocks),
            in_specs=[
                pl.BlockSpec((None, tTok, 1), lambda b, j, seq: (b, j, 0)),   # seg ids
                pl.BlockSpec(memory_space=pl.ANY),                            # token tbl (HBM)
                pl.BlockSpec((SEG_ROWS_PAD, H_pad), lambda b, j, seq: (0, 0)),
                pl.BlockSpec((tTok, H_pad), lambda b, j, seq: (j, 0)),        # positional rows
            ],
            out_specs=pl.BlockSpec((None, tTok, H_pad), lambda b, j, seq: (b, j, 0)),
            scratch_shapes=[
                pltpu.VMEM((tTok, H_pad), tok_p.dtype),     # gathered token rows
                pltpu.SemaphoreType.DMA((NBUF,)),           # DMA ring semaphores
            ],
        ),
        compiler_params=pltpu.CompilerParams(
            dimension_semantics=("parallel", "parallel"),
            vmem_limit_bytes=vmem_limit,
        ),
    )(seq_flat, seg_3d, tok_p, seg_p, pe_p)

    return out[:, :T, :H]


if __name__ == "__main__":
    # Small shapes consistent with the module's forward.
    B, T, H, V = 2, 8, 32, 32
    N_SEG = 3          # SegmentEmbedding has 3 rows

    key = jax.random.PRNGKey(0)
    k_tok, k_seg, k_seq, k_lab = jax.random.split(key, 4)

    # nn.Embedding default init is N(0, 1); padding_idx=0 row is zero.
    tok_table = jax.random.normal(k_tok, (V, H), dtype=jnp.float32)
    tok_table = tok_table.at[0].set(0.0)

    seg_table = jax.random.normal(k_seg, (N_SEG, H), dtype=jnp.float32)
    seg_table = seg_table.at[0].set(0.0)

    pe_full = make_positional_table(max_len=512, d_model=H)

    sequence = jax.random.randint(k_seq, (B, T), 0, V, dtype=jnp.int32)
    segment_label = jax.random.randint(k_lab, (B, T), 0, N_SEG, dtype=jnp.int32)

    out = bert_embedding(sequence, segment_label, tok_table, seg_table, pe_full)
    out = jax.block_until_ready(out)

    # Pure-JAX reference (eval-mode dropout == identity).
    ref = (tok_table[sequence]                 # token embedding
           + pe_full[:T][None, :, :]           # positional embedding
           + seg_table[segment_label])         # segment embedding
    assert out.shape == (B, T, H)
    assert jnp.allclose(out, ref, atol=1e-5, rtol=1e-5), "mismatch vs reference"

    print("KERNEL_OK")
</pallas_src>

<mosaic_0001>
module attributes {stable_mosaic.version = 11 : i64} {
  func.func @bert_embedding_kernel(%arg0: i32, %arg1: i32, %arg2: memref<16xi32, #tpu.memory_space<smem>>, %arg3: memref<1x8x1xi32, #tpu.memory_space<vmem>>, %arg4: memref<32x128xf32, #tpu.memory_space<any>>, %arg5: memref<8x128xf32, #tpu.memory_space<vmem>>, %arg6: memref<8x128xf32, #tpu.memory_space<vmem>>, %arg7: memref<1x8x128xf32, #tpu.memory_space<vmem>>, %arg8: memref<8x128xf32, #tpu.memory_space<vmem>>, %arg9: memref<8x!tpu.dma_semaphore, #tpu.memory_space<semaphore_mem>>) attributes {dimension_semantics = [#tpu.dimension_semantics<parallel>, #tpu.dimension_semantics<parallel>], iteration_bounds = array<i64: 2, 1>, scalar_prefetch = 1 : i64, scratch_operands = 2 : i64, tpu.core_type = #tpu.core_type<tc>, window_params = [{transform_indices = @transform_0, window_bounds = array<i64: 1, 8, 1>}, {}, {pipeline_mode = #tpu.pipeline_mode<synchronous>, transform_indices = @transform_2, window_bounds = array<i64: 8, 128>}, {transform_indices = @transform_3, window_bounds = array<i64: 8, 128>}, {transform_indices = @transform_4, window_bounds = array<i64: 1, 8, 128>}]} {
    %c8_i32 = arith.constant 8 : i32
    %0 = arith.muli %arg0, %c8_i32 : i32
    %c8_i32_0 = arith.constant 8 : i32
    %1 = arith.muli %arg1, %c8_i32_0 : i32
    %2 = arith.addi %0, %1 : i32
    %c0_i32 = arith.constant 0 : i32
    %3 = arith.addi %2, %c0_i32 : i32
    %4 = arith.index_cast %3 : i32 to index
    %5 = memref.load %arg2[%4] : memref<16xi32, #tpu.memory_space<smem>>
    %c0_i32_1 = arith.constant 0 : i32
    %c0_i32_2 = arith.constant 0 : i32
    %6 = tpu.memref_slice %arg4[%5, %c0_i32_2] : memref<32x128xf32, #tpu.memory_space<any>> -> memref<1x128xf32, #tpu.memory_space<any>>
    %c0_i32_3 = arith.constant 0 : i32
    %c0_i32_4 = arith.constant 0 : i32
    %7 = tpu.memref_slice %arg8[%c0_i32_3, %c0_i32_4] : memref<8x128xf32, #tpu.memory_space<vmem>> -> memref<1x128xf32, #tpu.memory_space<vmem>>
    %8 = tpu.memref_slice %arg9[%c0_i32_1] : memref<8x!tpu.dma_semaphore, #tpu.memory_space<semaphore_mem>> -> memref<1x!tpu.dma_semaphore, #tpu.memory_space<semaphore_mem>>
    %9 = tpu.memref_squeeze %8 : memref<1x!tpu.dma_semaphore, #tpu.memory_space<semaphore_mem>> -> memref<!tpu.dma_semaphore, #tpu.memory_space<semaphore_mem>>
    tpu.enqueue_dma source(%6 : memref<1x128xf32, #tpu.memory_space<any>>) target(%7 : memref<1x128xf32, #tpu.memory_space<vmem>>) target_semaphore(%9 : memref<!tpu.dma_semaphore, #tpu.memory_space<semaphore_mem>>)
    %c1_i32 = arith.constant 1 : i32
    %10 = arith.addi %2, %c1_i32 : i32
    %11 = arith.index_cast %10 : i32 to index
    %12 = memref.load %arg2[%11] : memref<16xi32, #tpu.memory_space<smem>>
    %c1_i32_5 = arith.constant 1 : i32
    %c0_i32_6 = arith.constant 0 : i32
    %13 = tpu.memref_slice %arg4[%12, %c0_i32_6] : memref<32x128xf32, #tpu.memory_space<any>> -> memref<1x128xf32, #tpu.memory_space<any>>
    %c1_i32_7 = arith.constant 1 : i32
    %c0_i32_8 = arith.constant 0 : i32
    %14 = tpu.memref_slice %arg8[%c1_i32_7, %c0_i32_8] : memref<8x128xf32, #tpu.memory_space<vmem>> -> memref<1x128xf32, #tpu.memory_space<vmem>>
    %15 = tpu.memref_slice %arg9[%c1_i32_5] : memref<8x!tpu.dma_semaphore, #tpu.memory_space<semaphore_mem>> -> memref<1x!tpu.dma_semaphore, #tpu.memory_space<semaphore_mem>>
    %16 = tpu.memref_squeeze %15 : memref<1x!tpu.dma_semaphore, #tpu.memory_space<semaphore_mem>> -> memref<!tpu.dma_semaphore, #tpu.memory_space<semaphore_mem>>
    tpu.enqueue_dma source(%13 : memref<1x128xf32, #tpu.memory_space<any>>) target(%14 : memref<1x128xf32, #tpu.memory_space<vmem>>) target_semaphore(%16 : memref<!tpu.dma_semaphore, #tpu.memory_space<semaphore_mem>>)
    %c2_i32 = arith.constant 2 : i32
    %17 = arith.addi %2, %c2_i32 : i32
    %18 = arith.index_cast %17 : i32 to index
    %19 = memref.load %arg2[%18] : memref<16xi32, #tpu.memory_space<smem>>
    %c2_i32_9 = arith.constant 2 : i32
    %c0_i32_10 = arith.constant 0 : i32
    %20 = tpu.memref_slice %arg4[%19, %c0_i32_10] : memref<32x128xf32, #tpu.memory_space<any>> -> memref<1x128xf32, #tpu.memory_space<any>>
    %c2_i32_11 = arith.constant 2 : i32
    %c0_i32_12 = arith.constant 0 : i32
    %21 = tpu.memref_slice %arg8[%c2_i32_11, %c0_i32_12] : memref<8x128xf32, #tpu.memory_space<vmem>> -> memref<1x128xf32, #tpu.memory_space<vmem>>
    %22 = tpu.memref_slice %arg9[%c2_i32_9] : memref<8x!tpu.dma_semaphore, #tpu.memory_space<semaphore_mem>> -> memref<1x!tpu.dma_semaphore, #tpu.memory_space<semaphore_mem>>
    %23 = tpu.memref_squeeze %22 : memref<1x!tpu.dma_semaphore, #tpu.memory_space<semaphore_mem>> -> memref<!tpu.dma_semaphore, #tpu.memory_space<semaphore_mem>>
    tpu.enqueue_dma source(%20 : memref<1x128xf32, #tpu.memory_space<any>>) target(%21 : memref<1x128xf32, #tpu.memory_space<vmem>>) target_semaphore(%23 : memref<!tpu.dma_semaphore, #tpu.memory_space<semaphore_mem>>)
    %c3_i32 = arith.constant 3 : i32
    %24 = arith.addi %2, %c3_i32 : i32
    %25 = arith.index_cast %24 : i32 to index
    %26 = memref.load %arg2[%25] : memref<16xi32, #tpu.memory_space<smem>>
    %c3_i32_13 = arith.constant 3 : i32
    %c0_i32_14 = arith.constant 0 : i32
    %27 = tpu.memref_slice %arg4[%26, %c0_i32_14] : memref<32x128xf32, #tpu.memory_space<any>> -> memref<1x128xf32, #tpu.memory_space<any>>
    %c3_i32_15 = arith.constant 3 : i32
    %c0_i32_16 = arith.constant 0 : i32
    %28 = tpu.memref_slice %arg8[%c3_i32_15, %c0_i32_16] : memref<8x128xf32, #tpu.memory_space<vmem>> -> memref<1x128xf32, #tpu.memory_space<vmem>>
    %29 = tpu.memref_slice %arg9[%c3_i32_13] : memref<8x!tpu.dma_semaphore, #tpu.memory_space<semaphore_mem>> -> memref<1x!tpu.dma_semaphore, #tpu.memory_space<semaphore_mem>>
    %30 = tpu.memref_squeeze %29 : memref<1x!tpu.dma_semaphore, #tpu.memory_space<semaphore_mem>> -> memref<!tpu.dma_semaphore, #tpu.memory_space<semaphore_mem>>
    tpu.enqueue_dma source(%27 : memref<1x128xf32, #tpu.memory_space<any>>) target(%28 : memref<1x128xf32, #tpu.memory_space<vmem>>) target_semaphore(%30 : memref<!tpu.dma_semaphore, #tpu.memory_space<semaphore_mem>>)
    %c4_i32 = arith.constant 4 : i32
    %31 = arith.addi %2, %c4_i32 : i32
    %32 = arith.index_cast %31 : i32 to index
    %33 = memref.load %arg2[%32] : memref<16xi32, #tpu.memory_space<smem>>
    %c4_i32_17 = arith.constant 4 : i32
    %c0_i32_18 = arith.constant 0 : i32
    %34 = tpu.memref_slice %arg4[%33, %c0_i32_18] : memref<32x128xf32, #tpu.memory_space<any>> -> memref<1x128xf32, #tpu.memory_space<any>>
    %c4_i32_19 = arith.constant 4 : i32
    %c0_i32_20 = arith.constant 0 : i32
    %35 = tpu.memref_slice %arg8[%c4_i32_19, %c0_i32_20] : memref<8x128xf32, #tpu.memory_space<vmem>> -> memref<1x128xf32, #tpu.memory_space<vmem>>
    %36 = tpu.memref_slice %arg9[%c4_i32_17] : memref<8x!tpu.dma_semaphore, #tpu.memory_space<semaphore_mem>> -> memref<1x!tpu.dma_semaphore, #tpu.memory_space<semaphore_mem>>
    %37 = tpu.memref_squeeze %36 : memref<1x!tpu.dma_semaphore, #tpu.memory_space<semaphore_mem>> -> memref<!tpu.dma_semaphore, #tpu.memory_space<semaphore_mem>>
    tpu.enqueue_dma source(%34 : memref<1x128xf32, #tpu.memory_space<any>>) target(%35 : memref<1x128xf32, #tpu.memory_space<vmem>>) target_semaphore(%37 : memref<!tpu.dma_semaphore, #tpu.memory_space<semaphore_mem>>)
    %c5_i32 = arith.constant 5 : i32
    %38 = arith.addi %2, %c5_i32 : i32
    %39 = arith.index_cast %38 : i32 to index
    %40 = memref.load %arg2[%39] : memref<16xi32, #tpu.memory_space<smem>>
    %c5_i32_21 = arith.constant 5 : i32
    %c0_i32_22 = arith.constant 0 : i32
    %41 = tpu.memref_slice %arg4[%40, %c0_i32_22] : memref<32x128xf32, #tpu.memory_space<any>> -> memref<1x128xf32, #tpu.memory_space<any>>
    %c5_i32_23 = arith.constant 5 : i32
    %c0_i32_24 = arith.constant 0 : i32
    %42 = tpu.memref_slice %arg8[%c5_i32_23, %c0_i32_24] : memref<8x128xf32, #tpu.memory_space<vmem>> -> memref<1x128xf32, #tpu.memory_space<vmem>>
    %43 = tpu.memref_slice %arg9[%c5_i32_21] : memref<8x!tpu.dma_semaphore, #tpu.memory_space<semaphore_mem>> -> memref<1x!tpu.dma_semaphore, #tpu.memory_space<semaphore_mem>>
    %44 = tpu.memref_squeeze %43 : memref<1x!tpu.dma_semaphore, #tpu.memory_space<semaphore_mem>> -> memref<!tpu.dma_semaphore, #tpu.memory_space<semaphore_mem>>
    tpu.enqueue_dma source(%41 : memref<1x128xf32, #tpu.memory_space<any>>) target(%42 : memref<1x128xf32, #tpu.memory_space<vmem>>) target_semaphore(%44 : memref<!tpu.dma_semaphore, #tpu.memory_space<semaphore_mem>>)
    %c6_i32 = arith.constant 6 : i32
    %45 = arith.addi %2, %c6_i32 : i32
    %46 = arith.index_cast %45 : i32 to index
    %47 = memref.load %arg2[%46] : memref<16xi32, #tpu.memory_space<smem>>
    %c6_i32_25 = arith.constant 6 : i32
    %c0_i32_26 = arith.constant 0 : i32
    %48 = tpu.memref_slice %arg4[%47, %c0_i32_26] : memref<32x128xf32, #tpu.memory_space<any>> -> memref<1x128xf32, #tpu.memory_space<any>>
    %c6_i32_27 = arith.constant 6 : i32
    %c0_i32_28 = arith.constant 0 : i32
    %49 = tpu.memref_slice %arg8[%c6_i32_27, %c0_i32_28] : memref<8x128xf32, #tpu.memory_space<vmem>> -> memref<1x128xf32, #tpu.memory_space<vmem>>
    %50 = tpu.memref_slice %arg9[%c6_i32_25] : memref<8x!tpu.dma_semaphore, #tpu.memory_space<semaphore_mem>> -> memref<1x!tpu.dma_semaphore, #tpu.memory_space<semaphore_mem>>
    %51 = tpu.memref_squeeze %50 : memref<1x!tpu.dma_semaphore, #tpu.memory_space<semaphore_mem>> -> memref<!tpu.dma_semaphore, #tpu.memory_space<semaphore_mem>>
    tpu.enqueue_dma source(%48 : memref<1x128xf32, #tpu.memory_space<any>>) target(%49 : memref<1x128xf32, #tpu.memory_space<vmem>>) target_semaphore(%51 : memref<!tpu.dma_semaphore, #tpu.memory_space<semaphore_mem>>)
    %c7_i32 = arith.constant 7 : i32
    %52 = arith.addi %2, %c7_i32 : i32
    %53 = arith.index_cast %52 : i32 to index
    %54 = memref.load %arg2[%53] : memref<16xi32, #tpu.memory_space<smem>>
    %c7_i32_29 = arith.constant 7 : i32
    %c0_i32_30 = arith.constant 0 : i32
    %55 = tpu.memref_slice %arg4[%54, %c0_i32_30] : memref<32x128xf32, #tpu.memory_space<any>> -> memref<1x128xf32, #tpu.memory_space<any>>
    %c7_i32_31 = arith.constant 7 : i32
    %c0_i32_32 = arith.constant 0 : i32
    %56 = tpu.memref_slice %arg8[%c7_i32_31, %c0_i32_32] : memref<8x128xf32, #tpu.memory_space<vmem>> -> memref<1x128xf32, #tpu.memory_space<vmem>>
    %57 = tpu.memref_slice %arg9[%c7_i32_29] : memref<8x!tpu.dma_semaphore, #tpu.memory_space<semaphore_mem>> -> memref<1x!tpu.dma_semaphore, #tpu.memory_space<semaphore_mem>>
    %58 = tpu.memref_squeeze %57 : memref<1x!tpu.dma_semaphore, #tpu.memory_space<semaphore_mem>> -> memref<!tpu.dma_semaphore, #tpu.memory_space<semaphore_mem>>
    tpu.enqueue_dma source(%55 : memref<1x128xf32, #tpu.memory_space<any>>) target(%56 : memref<1x128xf32, #tpu.memory_space<vmem>>) target_semaphore(%58 : memref<!tpu.dma_semaphore, #tpu.memory_space<semaphore_mem>>)
    %c0_i32_33 = arith.constant 0 : i32
    %c8_i32_34 = arith.constant 8 : i32
    %59 = arith.addi %c0_i32_33, %c8_i32_34 : i32
    %c1_i32_35 = arith.constant 1 : i32
    scf.for %arg10 = %c0_i32_33 to %59 step %c1_i32_35  : i32 {
      %c1_i32_52 = arith.constant 1 : i32
      %88 = arith.muli %arg10, %c1_i32_52 : i32
      %c0_i32_53 = arith.constant 0 : i32
      %89 = arith.addi %c0_i32_53, %88 : i32
      %c7_i32_54 = arith.constant 7 : i32
      %90 = arith.andi %89, %c7_i32_54 : i32
      %c0_i32_55 = arith.constant 0 : i32
      %c0_i32_56 = arith.constant 0 : i32
      %91 = tpu.memref_slice %arg4[%c0_i32_55, %c0_i32_56] : memref<32x128xf32, #tpu.memory_space<any>> -> memref<1x128xf32, #tpu.memory_space<any>>
      %c0_i32_57 = arith.constant 0 : i32
      %92 = tpu.memref_slice %arg8[%89, %c0_i32_57] : memref<8x128xf32, #tpu.memory_space<vmem>> -> memref<1x128xf32, #tpu.memory_space<vmem>>
      %93 = tpu.memref_slice %arg9[%90] : memref<8x!tpu.dma_semaphore, #tpu.memory_space<semaphore_mem>> -> memref<1x!tpu.dma_semaphore, #tpu.memory_space<semaphore_mem>>
      %94 = tpu.memref_squeeze %93 : memref<1x!tpu.dma_semaphore, #tpu.memory_space<semaphore_mem>> -> memref<!tpu.dma_semaphore, #tpu.memory_space<semaphore_mem>>
      tpu.wait_dma2 semaphore(%94 : memref<!tpu.dma_semaphore, #tpu.memory_space<semaphore_mem>>) src(%91 : memref<1x128xf32, #tpu.memory_space<any>>) dst(%92 : memref<1x128xf32, #tpu.memory_space<vmem>>)
      %c8_i32_58 = arith.constant 8 : i32
      %95 = arith.addi %89, %c8_i32_58 : i32
      %c8_i32_59 = arith.constant 8 : i32
      %96 = arith.cmpi slt, %95, %c8_i32_59 : i32
      %97 = arith.extui %96 : i1 to i32
      %c0_i32_60 = arith.constant 0 : i32
      %98 = arith.cmpi ne, %97, %c0_i32_60 : i32
      scf.if %98 {
        %c8_i32_61 = arith.constant 8 : i32
        %99 = arith.addi %89, %c8_i32_61 : i32
        %100 = arith.addi %2, %99 : i32
        %101 = arith.index_cast %100 : i32 to index
        %102 = memref.load %arg2[%101] : memref<16xi32, #tpu.memory_space<smem>>
        %c7_i32_62 = arith.constant 7 : i32
        %103 = arith.andi %99, %c7_i32_62 : i32
        %c0_i32_63 = arith.constant 0 : i32
        %104 = tpu.memref_slice %arg4[%102, %c0_i32_63] : memref<32x128xf32, #tpu.memory_space<any>> -> memref<1x128xf32, #tpu.memory_space<any>>
        %c0_i32_64 = arith.constant 0 : i32
        %105 = tpu.memref_slice %arg8[%99, %c0_i32_64] : memref<8x128xf32, #tpu.memory_space<vmem>> -> memref<1x128xf32, #tpu.memory_space<vmem>>
        %106 = tpu.memref_slice %arg9[%103] : memref<8x!tpu.dma_semaphore, #tpu.memory_space<semaphore_mem>> -> memref<1x!tpu.dma_semaphore, #tpu.memory_space<semaphore_mem>>
        %107 = tpu.memref_squeeze %106 : memref<1x!tpu.dma_semaphore, #tpu.memory_space<semaphore_mem>> -> memref<!tpu.dma_semaphore, #tpu.memory_space<semaphore_mem>>
        tpu.enqueue_dma source(%104 : memref<1x128xf32, #tpu.memory_space<any>>) target(%105 : memref<1x128xf32, #tpu.memory_space<vmem>>) target_semaphore(%107 : memref<!tpu.dma_semaphore, #tpu.memory_space<semaphore_mem>>)
      } else {
      }
    }
    %c8_i32_36 = arith.constant 8 : i32
    %c0 = arith.constant 0 : index
    %c0_37 = arith.constant 0 : index
    %c0_38 = arith.constant 0 : index
    %60 = vector.load %arg3[%c0, %c0_37, %c0_38] : memref<1x8x1xi32, #tpu.memory_space<vmem>>, vector<1x8x1xi32>
    %61 = vector.shape_cast %60 : vector<1x8x1xi32> to vector<8x1xi32>
    %c0_39 = arith.constant 0 : index
    %c0_40 = arith.constant 0 : index
    %62 = vector.load %arg5[%c0_39, %c0_40] : memref<8x128xf32, #tpu.memory_space<vmem>>, vector<1x128xf32>
    %c1 = arith.constant 1 : index
    %c0_41 = arith.constant 0 : index
    %63 = vector.load %arg5[%c1, %c0_41] : memref<8x128xf32, #tpu.memory_space<vmem>>, vector<1x128xf32>
    %c2 = arith.constant 2 : index
    %c0_42 = arith.constant 0 : index
    %64 = vector.load %arg5[%c2, %c0_42] : memref<8x128xf32, #tpu.memory_space<vmem>>, vector<1x128xf32>
    %c1_i32_43 = arith.constant 1 : i32
    %65 = vector.broadcast %c1_i32_43 : i32 to vector<8x1xi32>
    %66 = arith.cmpi eq, %61, %65 : vector<8x1xi32>
    %c2_i32_44 = arith.constant 2 : i32
    %67 = vector.broadcast %c2_i32_44 : i32 to vector<8x1xi32>
    %68 = arith.cmpi eq, %61, %67 : vector<8x1xi32>
    %69 = vector.shape_cast %68 : vector<8x1xi1> to vector<8x1xi1>
    %70 = vector.broadcast %69 : vector<8x1xi1> to vector<8x128xi1>
    %71 = vector.shape_cast %64 : vector<1x128xf32> to vector<1x128xf32>
    %72 = vector.broadcast %71 : vector<1x128xf32> to vector<8x128xf32>
    %73 = vector.shape_cast %62 : vector<1x128xf32> to vector<1x128xf32>
    %74 = vector.broadcast %73 : vector<1x128xf32> to vector<8x128xf32>
    %75 = arith.select %70, %72, %74 : vector<8x128xi1>, vector<8x128xf32>
    %76 = vector.shape_cast %66 : vector<8x1xi1> to vector<8x1xi1>
    %77 = vector.broadcast %76 : vector<8x1xi1> to vector<8x128xi1>
    %78 = vector.shape_cast %63 : vector<1x128xf32> to vector<1x128xf32>
    %79 = vector.broadcast %78 : vector<1x128xf32> to vector<8x128xf32>
    %80 = arith.select %77, %79, %75 : vector<8x128xi1>, vector<8x128xf32>
    %c0_45 = arith.constant 0 : index
    %c0_46 = arith.constant 0 : index
    %81 = vector.load %arg8[%c0_45, %c0_46] : memref<8x128xf32, #tpu.memory_space<vmem>>, vector<8x128xf32>
    %c0_47 = arith.constant 0 : index
    %c0_48 = arith.constant 0 : index
    %82 = vector.load %arg6[%c0_47, %c0_48] : memref<8x128xf32, #tpu.memory_space<vmem>>, vector<8x128xf32>
    %83 = arith.addf %81, %82 : vector<8x128xf32>
    %84 = arith.addf %83, %80 : vector<8x128xf32>
    %c0_49 = arith.constant 0 : index
    %c0_50 = arith.constant 0 : index
    %c0_51 = arith.constant 0 : index
    %85 = vector.load %arg7[%c0_49, %c0_50, %c0_51] : memref<1x8x128xf32, #tpu.memory_space<vmem>>, vector<1x8x128xf32>
    %86 = vector.shape_cast %85 : vector<1x8x128xf32> to vector<8x128xf32>
    %87 = vector.shape_cast %84 : vector<8x128xf32> to vector<1x8x128xf32>
    tpu.vector_store %arg7[%c0_49, %c0_50, %c0_51], %87 {strides = array<i32>} : memref<1x8x128xf32, #tpu.memory_space<vmem>>, vector<1x8x128xf32>,
    return
  }
  func.func @transform_0(%arg0: i32, %arg1: i32, %arg2: memref<16xi32, #tpu.memory_space<smem>>) -> (i32, i32, i32) {
    %c0_i32 = arith.constant 0 : i32
    %c0_i32_0 = arith.constant 0 : i32
    return %arg0, %arg1, %c0_i32 : i32, i32, i32
  }
  func.func @transform_2(%arg0: i32, %arg1: i32, %arg2: memref<16xi32, #tpu.memory_space<smem>>) -> (i32, i32) {
    %c0_i32 = arith.constant 0 : i32
    %c0_i32_0 = arith.constant 0 : i32
    %c0_i32_1 = arith.constant 0 : i32
    return %c0_i32, %c0_i32_0 : i32, i32
  }
  func.func @transform_3(%arg0: i32, %arg1: i32, %arg2: memref<16xi32, #tpu.memory_space<smem>>) -> (i32, i32) {
    %c0_i32 = arith.constant 0 : i32
    %c0_i32_0 = arith.constant 0 : i32
    return %arg1, %c0_i32 : i32, i32
  }
  func.func @transform_4(%arg0: i32, %arg1: i32, %arg2: memref<16xi32, #tpu.memory_space<smem>>) -> (i32, i32, i32) {
    %c0_i32 = arith.constant 0 : i32
    %c0_i32_0 = arith.constant 0 : i32
    return %arg0, %arg1, %c0_i32 : i32, i32, i32
  }
}

</mosaic_0001>

<llo_original>
// kernel: bert_embedding.1
$region0: #{bert_embedding.1}
  #allocation0 [shape = 'u32[]', space=smem, size = 0x4, offset = 0x4, fixed_abs, tag = 'smem constant byte address 0x4 - core index']
  #allocation1 [shape = 'u32[72,128]{1,0:T(1,128)}', space=vmem, size = 0x9000, scoped, tag = 'internal scratch']
  #allocation2 [shape = 'f32[8,128]{1,0:T(8,128)}', space=vmem, size = 0x1000, scoped, tag = 'scratch operand']
  #allocation3 [shape = 's32[8]{0}', space=sflag, size = 0x20, scoped, tag = 'scratch operand']
  #allocation4 [shape = 's32[1]{0}', space=sflag, size = 0x4, scoped, tag = 'scoped memory for bert_embedding.1']
  #allocation5 [shape = 'u8[512]{0}', space=smem, size = 0x200, scoped, tag = 'prefetched SMEM operand 0']
  #allocation8 [shape = 's32[]', space=sflag, size = 0x4, offset = 0, fixed_abs, tag = 'sflag constant byte address 0x0 - dummy sync flag']
  #allocation9 [shape = 's32[]', space=sflag, size = 0x4, offset = 0, fixed_abs, tag = 'sflag constant byte address 0x0 - dummy sync flag']
  #allocation10 [shape = 's32[]', space=sflag, size = 0x4, offset = 0, fixed_abs, tag = 'sflag constant byte address 0x0 - dummy sync flag']
  #allocation11 [shape = 's32[]', space=sflag, size = 0x4, offset = 0, fixed_abs, tag = 'sflag constant byte address 0x0 - dummy sync flag']
  #allocation12 [shape = 's32[]', space=sflag, size = 0x4, offset = 0, fixed_abs, tag = 'sflag constant byte address 0x0 - dummy sync flag']
  #allocation13 [shape = 's32[]', space=sflag, size = 0x4, offset = 0, fixed_abs, tag = 'sflag constant byte address 0x0 - dummy sync flag']
  #allocation14 [shape = 's32[]', space=sflag, size = 0x4, offset = 0, fixed_abs, tag = 'sflag constant byte address 0x0 - dummy sync flag']
  #allocation15 [shape = 's32[]', space=sflag, size = 0x4, offset = 0, fixed_abs, tag = 'sflag constant byte address 0x0 - dummy sync flag']
  #allocation16 [shape = 's32[]', space=sflag, size = 0x4, offset = 0, fixed_abs, tag = 'sflag constant byte address 0x0 - dummy sync flag']
  %s0 = inlined_call_operand.vmem [shape: s32[16], index: 0, kind: input, shape index: {}]
  %s1 = inlined_call_operand.vmem [shape: s32[2,8,1], index: 1, kind: input, shape index: {}]
  %s2 = inlined_call_operand.vmem [shape: f32[32,128], index: 2, kind: input, shape index: {}]
  %s3 = inlined_call_operand.vmem [shape: f32[8,128], index: 3, kind: input, shape index: {}]
  %s4 = inlined_call_operand.vmem [shape: f32[8,128], index: 4, kind: input, shape index: {}]
  %s5 = inlined_call_operand.hbm [shape: f32[2,8,128], index: 5, kind: output, shape index: {}]
  %s6 = sld [smem:[#allocation0]]
  $region326: #{bert_embedding.1} parent=0
    _
  %s8 = ssub.s32 1, %s6
  %s9 = scalar_select 0, %s8, %s6
  %s11 = sshll.u32 %s0, 4
  %s12 = int_to_ptr.vmem [resolvable:$true] %s11
  %14 = dma.vmem_to_smem %s12, 16, [#allocation5], [#allocation4]
  %16 = dma.done [#allocation4], 16
  %17 = sfence
  $region1: #{bert_embedding.1} parent=0
    #allocation6 [shape = 'u8[8192]{0}', space=vmem, size = 0x2000, scoped, tag = 'output window, operand 0']
    #allocation7 [shape = 's32[2]{0}', space=sflag, size = 0x8, scoped, tag = 'scoped memory for bert_embedding.1']
    %18 = vsyncpa [#allocation7], 0
    %s19 = scalar_lea.sflag [#allocation7], 1
    %20 = vsyncpa %s19, 0
    loop: start=0, step=1, limit=4
    $region2: #{bert_embedding.1} parent=1 // loop_pre_header
      _
    $region3: #{bert_embedding.1} parent=1 // loop_header
      %s22 = sphi 0, %s26
      %p23 = scmp.ge.s32.totalorder %s22, 4
      %s29 = sphi 0, %s41
      %s30 = sphi 0, %s37
      %s31 = sphi 0, %s29
      %s32 = sphi 0, %s30
      %s33 = sphi 0, %s31
      %s34 = sphi 0, %s32
      %s46 = sphi 0, %s48
      %s49 = sphi 0, %s46
      %s50 = sphi 0, %s49
      %s66 = sphi 0, %s50
      %s70 = sphi 0, %s70
      %s72 = sphi 0, %s70
      %s73 = sphi 0, %s72
      %s87 = sphi 0, %s73
      %s93 = sphi 0, %s95
      %s96 = sphi 0, %s93
      %s97 = sphi 0, %s96
      %s113 = sphi 0, %s97
      %s121 = sphi 0, %s123
      %s124 = sphi 0, %s121
      %s125 = sphi 0, %s124
      %s141 = sphi 0, %s125
    $region4: #{bert_embedding.1} parent=1 // loop_header_branch
      %25 = sbr.rel (%p23) target = $region8
    $region5: #{bert_embedding.1} parent=1 // loop_body
      %s27 = ssub.s32 %s22, 1
      %s28 = ssub.s32 %s22, 2
      %s35 = sadd.s32 1, %s30
      %p36 = scmp.ge.s32.totalorder %s35, 1
      %s37 = scalar_select %p36, 0, %s35
      %s38 = sadd.s32 1, %s29
      %s39 = scalar_select %p36, %s38, %s29
      %p40 = scmp.ge.s32.totalorder %s39, 2
      %s41 = scalar_select %p40, 0, %s39
      %s42 = ssub.s32 %s29, %s41
      %s43 = ssub.s32 %s30, %s37
      %s44 = sor.u32 %s42, %s43
      %p45 = scmp.eq.s32.totalorder %s44, 0
      %s47 = sadd.s32 %s46, 1
      %s48 = scalar_select %p45, %s46, %s47
      %p51 = pneg %p45
      %p52 = scmp.eq.s32.totalorder %s22, 1
      %p53 = por %p51, %p52
      %p54 = scmp.ne.s32.totalorder %s46, %s49
      %p55 = scmp.eq.s32.totalorder %s22, 0
      %p56 = por %p54, %p55
      %p57 = scmp.ne.s32.totalorder %s46, %s49
      %p58 = scmp.eq.s32.totalorder %s27, 1
      %p59 = por %p57, %p58
      %p60 = scmp.ne.s32.totalorder %s49, %s50
      %p61 = scmp.eq.s32.totalorder %s27, 0
      %p62 = por %p60, %p61
      %p63 = scmp.ne.s32.totalorder %s49, %s50
      %p64 = scmp.eq.s32.totalorder %s28, 1
      %p65 = por %p63, %p64
      %p67 = scmp.ne.s32.totalorder %s50, %s66
      %p68 = scmp.eq.s32.totalorder %s28, 0
      %p69 = por %p67, %p68
      %s71 = sadd.s32 %s70, 1
      %p74 = scmp.eq.s32.totalorder %s22, 1
      %p75 = scmp.ne.s32.totalorder %s70, %s72
      %p76 = scmp.eq.s32.totalorder %s22, 0
      %p77 = por %p75, %p76
      %p78 = scmp.ne.s32.totalorder %s70, %s72
      %p79 = scmp.eq.s32.totalorder %s27, 1
      %p80 = por %p78, %p79
      %p81 = scmp.ne.s32.totalorder %s72, %s73
      %p82 = scmp.eq.s32.totalorder %s27, 0
      %p83 = por %p81, %p82
      %p84 = scmp.ne.s32.totalorder %s72, %s73
      %p85 = scmp.eq.s32.totalorder %s28, 1
      %p86 = por %p84, %p85
      %p88 = scmp.ne.s32.totalorder %s73, %s87
      %p89 = scmp.eq.s32.totalorder %s28, 0
      %p90 = por %p88, %p89
      %s91 = ssub.s32 %s30, %s37
      %p92 = scmp.eq.s32.totalorder %s91, 0
      %s94 = sadd.s32 %s93, 1
      %s95 = scalar_select %p92, %s93, %s94
      %p98 = pneg %p92
      %p99 = scmp.eq.s32.totalorder %s22, 1
      %p100 = por %p98, %p99
      %p101 = scmp.ne.s32.totalorder %s93, %s96
      %p102 = scmp.eq.s32.totalorder %s22, 0
      %p103 = por %p101, %p102
      %p104 = scmp.ne.s32.totalorder %s93, %s96
      %p105 = scmp.eq.s32.totalorder %s27, 1
      %p106 = por %p104, %p105
      %p107 = scmp.ne.s32.totalorder %s96, %s97
      %p108 = scmp.eq.s32.totalorder %s27, 0
      %p109 = por %p107, %p108
      %p110 = scmp.ne.s32.totalorder %s96, %s97
      %p111 = scmp.eq.s32.totalorder %s28, 1
      %p112 = por %p110, %p111
      %p114 = scmp.ne.s32.totalorder %s97, %s113
      %p115 = scmp.eq.s32.totalorder %s28, 0
      %p116 = por %p114, %p115
      %s117 = ssub.s32 %s29, %s41
      %s118 = ssub.s32 %s30, %s37
      %s119 = sor.u32 %s117, %s118
      %p120 = scmp.eq.s32.totalorder %s119, 0
      %s122 = sadd.s32 %s121, 1
      %s123 = scalar_select %p120, %s121, %s122
      %p126 = pneg %p120
      %p127 = scmp.eq.s32.totalorder %s22, 1
      %p128 = por %p126, %p127
      %p129 = scmp.ne.s32.totalorder %s121, %s124
      %p130 = scmp.eq.s32.totalorder %s22, 0
      %p131 = por %p129, %p130
      %p132 = scmp.ne.s32.totalorder %s121, %s124
      %p133 = scmp.eq.s32.totalorder %s27, 1
      %p134 = por %p132, %p133
      %p135 = scmp.ne.s32.totalorder %s124, %s125
      %p136 = scmp.eq.s32.totalorder %s27, 0
      %p137 = por %p135, %p136
      %p138 = scmp.ne.s32.totalorder %s124, %s125
      %p139 = scmp.eq.s32.totalorder %s28, 1
      %p140 = por %p138, %p139
      %p142 = scmp.ne.s32.totalorder %s125, %s141
      %p143 = scmp.eq.s32.totalorder %s28, 0
      %p144 = por %p142, %p143
      %p145 = scmp.le.s32.totalorder 1, %s22
      %p146 = scmp.lt.s32.totalorder %s22, 3
      %p147 = pnand %p145, %p146
      %p148 = pneg %p147
      // Predicated region
      $region9: #{bert_embedding.1} parent=5 // pred_check
        _
      $region10: #{bert_embedding.1} parent=5 // pred_check_branch
        %150 = sbr.rel (%p147) target = $region12
      $region11: #{bert_embedding.1} parent=5 // pred_region
        %s151 = ssub.s32 %s22, 1
        // Predicated region
        $region13: #{bert_embedding.1} parent=11 // pred_check
          %p152 = pneg %p83
        $region14: #{bert_embedding.1} parent=11 // pred_check_branch
          %154 = sbr.rel (%p152) target = $region16
        $region15: #{bert_embedding.1} parent=11 // pred_region
          _
        $region16: #{bert_embedding.1} parent=11 // pred_fallthru
          _
        // Predicated region
        $region17: #{bert_embedding.1} parent=11 // pred_check
          %p155 = pneg %p109
        $region18: #{bert_embedding.1} parent=11 // pred_check_branch
          %157 = sbr.rel (%p155) target = $region20
        $region19: #{bert_embedding.1} parent=11 // pred_region
          %p158 = scmp.lt.s32.totalorder %s32, 0
          %s159 = scalar_select %p158, %s32, 0
          %s160 = smul.addr %s159, 8
          %s161 = scalar_lea.vmem %s4, %s160
        $region20: #{bert_embedding.1} parent=11 // pred_fallthru
          _
      $region12: #{bert_embedding.1} parent=5 // pred_fallthru
        _
      %p162 = scmp.lt.s32.totalorder %s22, 2
      // Predicated region
      $region21: #{bert_embedding.1} parent=5 // pred_check
        %p163 = pneg %p162
      $region22: #{bert_embedding.1} parent=5 // pred_check_branch
        %165 = sbr.rel (%p163) target = $region24
      $region23: #{bert_embedding.1} parent=5 // pred_region
        // Predicated region
        $region25: #{bert_embedding.1} parent=23 // pred_check
          %p166 = pneg %p56
        $region26: #{bert_embedding.1} parent=23 // pred_check_branch
          %168 = sbr.rel (%p166) target = $region28
        $region27: #{bert_embedding.1} parent=23 // pred_region
          %p169 = scmp.lt.s32.totalorder %s29, 1
          %s170 = scalar_select %p169, %s29, 1
          %p171 = scmp.lt.s32.totalorder %s30, 0
          %s172 = scalar_select %p171, %s30, 0
          %s173 = sadd.s32 %s172, %s170
          %s174 = smul.addr %s173, 8
          %s175 = scalar_lea.vmem %s1, %s174
        $region28: #{bert_embedding.1} parent=23 // pred_fallthru
          _
      $region24: #{bert_embedding.1} parent=5 // pred_fallthru
        _
      %p176 = scmp.le.s32.totalorder 1, %s22
      %p177 = scmp.lt.s32.totalorder %s22, 3
      %p178 = pnand %p176, %p177
      %p179 = pneg %p178
      // Predicated region
      $region29: #{bert_embedding.1} parent=5 // pred_check
        _
      $region30: #{bert_embedding.1} parent=5 // pred_check_branch
        %181 = sbr.rel (%p178) target = $region32
      $region31: #{bert_embedding.1} parent=5 // pred_region
        %s182 = ssub.s32 %s22, 1
        %p183 = scmp.lt.s32.totalorder %s31, 1
        %s184 = scalar_select %p183, %s31, 1
        %p185 = scmp.lt.s32.totalorder %s32, 0
        %s186 = scalar_select %p185, %s32, 0
        %s187 = sadd.s32 %s186, %s184
        %s188 = smul.addr %s187, 8
        %s189 = scalar_lea.vmem %s1, %s188
        %p190 = pneg %p62
        %p191 = pneg %p59
        %p192 = pneg %p83
        %p193 = pneg %p80
        %p194 = scmp.lt.s32.totalorder %s32, 0
        %s195 = scalar_select %p194, %s32, 0
        %s196 = smul.addr %s195, 8
        %s197 = scalar_lea.vmem %s4, %s196
        %p198 = pneg %p109
        %p199 = pneg %p106
        %p200 = pneg %p137
        %p201 = pneg %p134
        %s202 = sand.u32 %s124, 1
        %s203 = scalar_lea.sflag [#allocation7], %s202
        %s204 = sand.u32 %s124, 1
        %s205 = smul.addr %s204, 8
        %s206 = scalar_lea.vmem [#allocation6], %s205
        %p207 = scmp.lt.s32.totalorder %s31, 1
        %s208 = scalar_select %p207, %s31, 1
        %p209 = scmp.lt.s32.totalorder %s32, 0
        %s210 = scalar_select %p209, %s32, 0
        %s211 = sadd.s32 %s210, %s208
        %s212 = smul.addr %s211, 8
        %s213 = scalar_lea.vmem %s1, %s212
        %p214 = scmp.lt.s32.totalorder %s32, 0
        %s215 = scalar_select %p214, %s32, 0
        %s216 = smul.addr %s215, 8
        %s217 = scalar_lea.vmem %s4, %s216
        %s218 = smul.u32 %s31, 8
        %s219 = smul.u32 %s32, 8
        %s220 = sadd.s32 %s218, %s219
        %s221 = sld [smem:[#allocation5 + %s220]]
        %s222 = scalar_lea.vmem %s2, %s221
        // Predicated region
        $region33: #{bert_embedding.1} parent=31 // pred_check
          _
        $region34: #{bert_embedding.1} parent=31 // pred_check_branch
          %224 = sbr.rel target = $region36
        $region35: #{bert_embedding.1} parent=31 // pred_region
          // Predicated region
          $region48: #{bert_embedding.1} parent=35 // pred_check
            _
          $region49: #{bert_embedding.1} parent=35 // pred_check_branch
            %240 = sbr.rel (0) target = $region51
          $region50: #{bert_embedding.1} parent=35 // pred_region
            %s242 = ssub.s32 2, 1
            loop: start=0, step=1, limit=1
            $region52: #{bert_embedding.1} parent=50 // loop_pre_header
              _
            $region53: #{bert_embedding.1} parent=50 // loop_header
              %s244 = sphi 0, %s248
              %p245 = scmp.ge.s32.totalorder %s244, 1
              %s249 = sphi %s222, %s222
              %s250 = sphi [#allocation2], [#allocation2]
            $region54: #{bert_embedding.1} parent=50 // loop_header_branch
              %247 = sbr.rel (%p245) target = $region58
            $region55: #{bert_embedding.1} parent=50 // loop_body
              %v251 = vld [vmem:[%s249] sm:%s242]
              %252 = vst [vmem:[%s250] sm:%s242] %v251
            $region56: #{bert_embedding.1} parent=50 // loop_footer
              %s248 = sadd.s32 1, %s244
            $region57: #{bert_embedding.1} parent=50 // loop_footer_branch
              %243 = sbr.rel target = $region53
            $region58: #{bert_embedding.1} parent=50 // loop_exit
              _
          $region51: #{bert_embedding.1} parent=35 // pred_fallthru
            _
        $region36: #{bert_embedding.1} parent=31 // pred_fallthru
          _
        // Predicated region
        $region37: #{bert_embedding.1} parent=31 // pred_check
          _
        $region38: #{bert_embedding.1} parent=31 // pred_check_branch
          %226 = sbr.rel (0) target = $region40
        $region39: #{bert_embedding.1} parent=31 // pred_region
          %s228 = ssub.s32 2, 1
          loop: start=0, step=1, limit=1
          $region41: #{bert_embedding.1} parent=39 // loop_pre_header
            _
          $region42: #{bert_embedding.1} parent=39 // loop_header
            %s230 = sphi 0, %s234
            %p231 = scmp.ge.s32.totalorder %s230, 1
            %s235 = sphi %s222, %s222
            %s236 = sphi [#allocation2], [#allocation2]
          $region43: #{bert_embedding.1} parent=39 // loop_header_branch
            %233 = sbr.rel (%p231) target = $region47
          $region44: #{bert_embedding.1} parent=39 // loop_body
            %v237 = vld [vmem:[%s235] sm:%s228]
            %238 = vst [vmem:[%s236] sm:%s228] %v237
          $region45: #{bert_embedding.1} parent=39 // loop_footer
            %s234 = sadd.s32 1, %s230
          $region46: #{bert_embedding.1} parent=39 // loop_footer_branch
            %229 = sbr.rel target = $region42
          $region47: #{bert_embedding.1} parent=39 // loop_exit
            _
        $region40: #{bert_embedding.1} parent=31 // pred_fallthru
          _
        // Predicated region
        $region59: #{bert_embedding.1} parent=31 // pred_check
          _
        $region60: #{bert_embedding.1} parent=31 // pred_check_branch
          %255 = sbr.rel (0) target = $region62
        $region61: #{bert_embedding.1} parent=31 // pred_region
          %256 = vsyncadd [#allocation3], 16
        $region62: #{bert_embedding.1} parent=31 // pred_fallthru
          _
        %s257 = sadd.s32 %s220, 1
        %s258 = sld [smem:[#allocation5 + %s257]]
        %s259 = scalar_lea.vmem %s2, %s258
        %s260 = scalar_lea.vmem [#allocation2], 1
        %s261 = scalar_lea.sflag [#allocation3], 1
        // Predicated region
        $region63: #{bert_embedding.1} parent=31 // pred_check
          _
        $region64: #{bert_embedding.1} parent=31 // pred_check_branch
          %263 = sbr.rel target = $region66
        $region65: #{bert_embedding.1} parent=31 // pred_region
          // Predicated region
          $region78: #{bert_embedding.1} parent=65 // pred_check
            _
          $region79: #{bert_embedding.1} parent=65 // pred_check_branch
            %279 = sbr.rel (0) target = $region81
          $region80: #{bert_embedding.1} parent=65 // pred_region
            %s281 = ssub.s32 2, 1
            loop: start=0, step=1, limit=1
            $region82: #{bert_embedding.1} parent=80 // loop_pre_header
              _
            $region83: #{bert_embedding.1} parent=80 // loop_header
              %s283 = sphi 0, %s287
              %p284 = scmp.ge.s32.totalorder %s283, 1
              %s288 = sphi %s259, %s259
              %s289 = sphi %s260, %s260
            $region84: #{bert_embedding.1} parent=80 // loop_header_branch
              %286 = sbr.rel (%p284) target = $region88
            $region85: #{bert_embedding.1} parent=80 // loop_body
              %v290 = vld [vmem:[%s288] sm:%s281]
              %291 = vst [vmem:[%s289] sm:%s281] %v290
            $region86: #{bert_embedding.1} parent=80 // loop_footer
              %s287 = sadd.s32 1, %s283
            $region87: #{bert_embedding.1} parent=80 // loop_footer_branch
              %282 = sbr.rel target = $region83
            $region88: #{bert_embedding.1} parent=80 // loop_exit
              _
          $region81: #{bert_embedding.1} parent=65 // pred_fallthru
            _
        $region66: #{bert_embedding.1} parent=31 // pred_fallthru
          _
        // Predicated region
        $region67: #{bert_embedding.1} parent=31 // pred_check
          _
        $region68: #{bert_embedding.1} parent=31 // pred_check_branch
          %265 = sbr.rel (0) target = $region70
        $region69: #{bert_embedding.1} parent=31 // pred_region
          %s267 = ssub.s32 2, 1
          loop: start=0, step=1, limit=1
          $region71: #{bert_embedding.1} parent=69 // loop_pre_header
            _
          $region72: #{bert_embedding.1} parent=69 // loop_header
            %s269 = sphi 0, %s273
            %p270 = scmp.ge.s32.totalorder %s269, 1
            %s274 = sphi %s259, %s259
            %s275 = sphi %s260, %s260
          $region73: #{bert_embedding.1} parent=69 // loop_header_branch
            %272 = sbr.rel (%p270) target = $region77
          $region74: #{bert_embedding.1} parent=69 // loop_body
            %v276 = vld [vmem:[%s274] sm:%s267]
            %277 = vst [vmem:[%s275] sm:%s267] %v276
          $region75: #{bert_embedding.1} parent=69 // loop_footer
            %s273 = sadd.s32 1, %s269
          $region76: #{bert_embedding.1} parent=69 // loop_footer_branch
            %268 = sbr.rel target = $region72
          $region77: #{bert_embedding.1} parent=69 // loop_exit
            _
        $region70: #{bert_embedding.1} parent=31 // pred_fallthru
          _
        // Predicated region
        $region89: #{bert_embedding.1} parent=31 // pred_check
          _
        $region90: #{bert_embedding.1} parent=31 // pred_check_branch
          %294 = sbr.rel (0) target = $region92
        $region91: #{bert_embedding.1} parent=31 // pred_region
          %295 = vsyncadd %s261, 16
        $region92: #{bert_embedding.1} parent=31 // pred_fallthru
          _
        %s296 = sadd.s32 %s220, 2
        %s297 = sld [smem:[#allocation5 + %s296]]
        %s298 = scalar_lea.vmem %s2, %s297
        %s299 = scalar_lea.vmem [#allocation2], 2
        %s300 = scalar_lea.sflag [#allocation3], 2
        // Predicated region
        $region93: #{bert_embedding.1} parent=31 // pred_check
          _
        $region94: #{bert_embedding.1} parent=31 // pred_check_branch
          %302 = sbr.rel target = $region96
        $region95: #{bert_embedding.1} parent=31 // pred_region
          // Predicated region
          $region108: #{bert_embedding.1} parent=95 // pred_check
            _
          $region109: #{bert_embedding.1} parent=95 // pred_check_branch
            %318 = sbr.rel (0) target = $region111
          $region110: #{bert_embedding.1} parent=95 // pred_region
            %s320 = ssub.s32 2, 1
            loop: start=0, step=1, limit=1
            $region112: #{bert_embedding.1} parent=110 // loop_pre_header
              _
            $region113: #{bert_embedding.1} parent=110 // loop_header
              %s322 = sphi 0, %s326
              %p323 = scmp.ge.s32.totalorder %s322, 1
              %s327 = sphi %s298, %s298
              %s328 = sphi %s299, %s299
            $region114: #{bert_embedding.1} parent=110 // loop_header_branch
              %325 = sbr.rel (%p323) target = $region118
            $region115: #{bert_embedding.1} parent=110 // loop_body
              %v329 = vld [vmem:[%s327] sm:%s320]
              %330 = vst [vmem:[%s328] sm:%s320] %v329
            $region116: #{bert_embedding.1} parent=110 // loop_footer
              %s326 = sadd.s32 1, %s322
            $region117: #{bert_embedding.1} parent=110 // loop_footer_branch
              %321 = sbr.rel target = $region113
            $region118: #{bert_embedding.1} parent=110 // loop_exit
              _
          $region111: #{bert_embedding.1} parent=95 // pred_fallthru
            _
        $region96: #{bert_embedding.1} parent=31 // pred_fallthru
          _
        // Predicated region
        $region97: #{bert_embedding.1} parent=31 // pred_check
          _
        $region98: #{bert_embedding.1} parent=31 // pred_check_branch
          %304 = sbr.rel (0) target = $region100
        $region99: #{bert_embedding.1} parent=31 // pred_region
          %s306 = ssub.s32 2, 1
          loop: start=0, step=1, limit=1
          $region101: #{bert_embedding.1} parent=99 // loop_pre_header
            _
          $region102: #{bert_embedding.1} parent=99 // loop_header
            %s308 = sphi 0, %s312
            %p309 = scmp.ge.s32.totalorder %s308, 1
            %s313 = sphi %s298, %s298
            %s314 = sphi %s299, %s299
          $region103: #{bert_embedding.1} parent=99 // loop_header_branch
            %311 = sbr.rel (%p309) target = $region107
          $region104: #{bert_embedding.1} parent=99 // loop_body
            %v315 = vld [vmem:[%s313] sm:%s306]
            %316 = vst [vmem:[%s314] sm:%s306] %v315
          $region105: #{bert_embedding.1} parent=99 // loop_footer
            %s312 = sadd.s32 1, %s308
          $region106: #{bert_embedding.1} parent=99 // loop_footer_branch
            %307 = sbr.rel target = $region102
          $region107: #{bert_embedding.1} parent=99 // loop_exit
            _
        $region100: #{bert_embedding.1} parent=31 // pred_fallthru
          _
        // Predicated region
        $region119: #{bert_embedding.1} parent=31 // pred_check
          _
        $region120: #{bert_embedding.1} parent=31 // pred_check_branch
          %333 = sbr.rel (0) target = $region122
        $region121: #{bert_embedding.1} parent=31 // pred_region
          %334 = vsyncadd %s300, 16
        $region122: #{bert_embedding.1} parent=31 // pred_fallthru
          _
        %s335 = sadd.s32 %s220, 3
        %s336 = sld [smem:[#allocation5 + %s335]]
        %s337 = scalar_lea.vmem %s2, %s336
        %s338 = scalar_lea.vmem [#allocation2], 3
        %s339 = scalar_lea.sflag [#allocation3], 3
        // Predicated region
        $region123: #{bert_embedding.1} parent=31 // pred_check
          _
        $region124: #{bert_embedding.1} parent=31 // pred_check_branch
          %341 = sbr.rel target = $region126
        $region125: #{bert_embedding.1} parent=31 // pred_region
          // Predicated region
          $region138: #{bert_embedding.1} parent=125 // pred_check
            _
          $region139: #{bert_embedding.1} parent=125 // pred_check_branch
            %357 = sbr.rel (0) target = $region141
          $region140: #{bert_embedding.1} parent=125 // pred_region
            %s359 = ssub.s32 2, 1
            loop: start=0, step=1, limit=1
            $region142: #{bert_embedding.1} parent=140 // loop_pre_header
              _
            $region143: #{bert_embedding.1} parent=140 // loop_header
              %s361 = sphi 0, %s365
              %p362 = scmp.ge.s32.totalorder %s361, 1
              %s366 = sphi %s337, %s337
              %s367 = sphi %s338, %s338
            $region144: #{bert_embedding.1} parent=140 // loop_header_branch
              %364 = sbr.rel (%p362) target = $region148
            $region145: #{bert_embedding.1} parent=140 // loop_body
              %v368 = vld [vmem:[%s366] sm:%s359]
              %369 = vst [vmem:[%s367] sm:%s359] %v368
            $region146: #{bert_embedding.1} parent=140 // loop_footer
              %s365 = sadd.s32 1, %s361
            $region147: #{bert_embedding.1} parent=140 // loop_footer_branch
              %360 = sbr.rel target = $region143
            $region148: #{bert_embedding.1} parent=140 // loop_exit
              _
          $region141: #{bert_embedding.1} parent=125 // pred_fallthru
            _
        $region126: #{bert_embedding.1} parent=31 // pred_fallthru
          _
        // Predicated region
        $region127: #{bert_embedding.1} parent=31 // pred_check
          _
        $region128: #{bert_embedding.1} parent=31 // pred_check_branch
          %343 = sbr.rel (0) target = $region130
        $region129: #{bert_embedding.1} parent=31 // pred_region
          %s345 = ssub.s32 2, 1
          loop: start=0, step=1, limit=1
          $region131: #{bert_embedding.1} parent=129 // loop_pre_header
            _
          $region132: #{bert_embedding.1} parent=129 // loop_header
            %s347 = sphi 0, %s351
            %p348 = scmp.ge.s32.totalorder %s347, 1
            %s352 = sphi %s337, %s337
            %s353 = sphi %s338, %s338
          $region133: #{bert_embedding.1} parent=129 // loop_header_branch
            %350 = sbr.rel (%p348) target = $region137
          $region134: #{bert_embedding.1} parent=129 // loop_body
            %v354 = vld [vmem:[%s352] sm:%s345]
            %355 = vst [vmem:[%s353] sm:%s345] %v354
          $region135: #{bert_embedding.1} parent=129 // loop_footer
            %s351 = sadd.s32 1, %s347
          $region136: #{bert_embedding.1} parent=129 // loop_footer_branch
            %346 = sbr.rel target = $region132
          $region137: #{bert_embedding.1} parent=129 // loop_exit
            _
        $region130: #{bert_embedding.1} parent=31 // pred_fallthru
          _
        // Predicated region
        $region149: #{bert_embedding.1} parent=31 // pred_check
          _
        $region150: #{bert_embedding.1} parent=31 // pred_check_branch
          %372 = sbr.rel (0) target = $region152
        $region151: #{bert_embedding.1} parent=31 // pred_region
          %373 = vsyncadd %s339, 16
        $region152: #{bert_embedding.1} parent=31 // pred_fallthru
          _
        %s374 = sadd.s32 %s220, 4
        %s375 = sld [smem:[#allocation5 + %s374]]
        %s376 = scalar_lea.vmem %s2, %s375
        %s377 = scalar_lea.vmem [#allocation2], 4
        %s378 = scalar_lea.sflag [#allocation3], 4
        // Predicated region
        $region153: #{bert_embedding.1} parent=31 // pred_check
          _
        $region154: #{bert_embedding.1} parent=31 // pred_check_branch
          %380 = sbr.rel target = $region156
        $region155: #{bert_embedding.1} parent=31 // pred_region
          // Predicated region
          $region168: #{bert_embedding.1} parent=155 // pred_check
            _
          $region169: #{bert_embedding.1} parent=155 // pred_check_branch
            %396 = sbr.rel (0) target = $region171
          $region170: #{bert_embedding.1} parent=155 // pred_region
            %s398 = ssub.s32 2, 1
            loop: start=0, step=1, limit=1
            $region172: #{bert_embedding.1} parent=170 // loop_pre_header
              _
            $region173: #{bert_embedding.1} parent=170 // loop_header
              %s400 = sphi 0, %s404
              %p401 = scmp.ge.s32.totalorder %s400, 1
              %s405 = sphi %s376, %s376
              %s406 = sphi %s377, %s377
            $region174: #{bert_embedding.1} parent=170 // loop_header_branch
              %403 = sbr.rel (%p401) target = $region178
            $region175: #{bert_embedding.1} parent=170 // loop_body
              %v407 = vld [vmem:[%s405] sm:%s398]
              %408 = vst [vmem:[%s406] sm:%s398] %v407
            $region176: #{bert_embedding.1} parent=170 // loop_footer
              %s404 = sadd.s32 1, %s400
            $region177: #{bert_embedding.1} parent=170 // loop_footer_branch
              %399 = sbr.rel target = $region173
            $region178: #{bert_embedding.1} parent=170 // loop_exit
              _
          $region171: #{bert_embedding.1} parent=155 // pred_fallthru
            _
        $region156: #{bert_embedding.1} parent=31 // pred_fallthru
          _
        // Predicated region
        $region157: #{bert_embedding.1} parent=31 // pred_check
          _
        $region158: #{bert_embedding.1} parent=31 // pred_check_branch
          %382 = sbr.rel (0) target = $region160
        $region159: #{bert_embedding.1} parent=31 // pred_region
          %s384 = ssub.s32 2, 1
          loop: start=0, step=1, limit=1
          $region161: #{bert_embedding.1} parent=159 // loop_pre_header
            _
          $region162: #{bert_embedding.1} parent=159 // loop_header
            %s386 = sphi 0, %s390
            %p387 = scmp.ge.s32.totalorder %s386, 1
            %s391 = sphi %s376, %s376
            %s392 = sphi %s377, %s377
          $region163: #{bert_embedding.1} parent=159 // loop_header_branch
            %389 = sbr.rel (%p387) target = $region167
          $region164: #{bert_embedding.1} parent=159 // loop_body
            %v393 = vld [vmem:[%s391] sm:%s384]
            %394 = vst [vmem:[%s392] sm:%s384] %v393
          $region165: #{bert_embedding.1} parent=159 // loop_footer
            %s390 = sadd.s32 1, %s386
          $region166: #{bert_embedding.1} parent=159 // loop_footer_branch
            %385 = sbr.rel target = $region162
          $region167: #{bert_embedding.1} parent=159 // loop_exit
            _
        $region160: #{bert_embedding.1} parent=31 // pred_fallthru
          _
        // Predicated region
        $region179: #{bert_embedding.1} parent=31 // pred_check
          _
        $region180: #{bert_embedding.1} parent=31 // pred_check_branch
          %411 = sbr.rel (0) target = $region182
        $region181: #{bert_embedding.1} parent=31 // pred_region
          %412 = vsyncadd %s378, 16
        $region182: #{bert_embedding.1} parent=31 // pred_fallthru
          _
        %s413 = sadd.s32 %s220, 5
        %s414 = sld [smem:[#allocation5 + %s413]]
        %s415 = scalar_lea.vmem %s2, %s414
        %s416 = scalar_lea.vmem [#allocation2], 5
        %s417 = scalar_lea.sflag [#allocation3], 5
        // Predicated region
        $region183: #{bert_embedding.1} parent=31 // pred_check
          _
        $region184: #{bert_embedding.1} parent=31 // pred_check_branch
          %419 = sbr.rel target = $region186
        $region185: #{bert_embedding.1} parent=31 // pred_region
          // Predicated region
          $region198: #{bert_embedding.1} parent=185 // pred_check
            _
          $region199: #{bert_embedding.1} parent=185 // pred_check_branch
            %435 = sbr.rel (0) target = $region201
          $region200: #{bert_embedding.1} parent=185 // pred_region
            %s437 = ssub.s32 2, 1
            loop: start=0, step=1, limit=1
            $region202: #{bert_embedding.1} parent=200 // loop_pre_header
              _
            $region203: #{bert_embedding.1} parent=200 // loop_header
              %s439 = sphi 0, %s443
              %p440 = scmp.ge.s32.totalorder %s439, 1
              %s444 = sphi %s415, %s415
              %s445 = sphi %s416, %s416
            $region204: #{bert_embedding.1} parent=200 // loop_header_branch
              %442 = sbr.rel (%p440) target = $region208
            $region205: #{bert_embedding.1} parent=200 // loop_body
              %v446 = vld [vmem:[%s444] sm:%s437]
              %447 = vst [vmem:[%s445] sm:%s437] %v446
            $region206: #{bert_embedding.1} parent=200 // loop_footer
              %s443 = sadd.s32 1, %s439
            $region207: #{bert_embedding.1} parent=200 // loop_footer_branch
              %438 = sbr.rel target = $region203
            $region208: #{bert_embedding.1} parent=200 // loop_exit
              _
          $region201: #{bert_embedding.1} parent=185 // pred_fallthru
            _
        $region186: #{bert_embedding.1} parent=31 // pred_fallthru
          _
        // Predicated region
        $region187: #{bert_embedding.1} parent=31 // pred_check
          _
        $region188: #{bert_embedding.1} parent=31 // pred_check_branch
          %421 = sbr.rel (0) target = $region190
        $region189: #{bert_embedding.1} parent=31 // pred_region
          %s423 = ssub.s32 2, 1
          loop: start=0, step=1, limit=1
          $region191: #{bert_embedding.1} parent=189 // loop_pre_header
            _
          $region192: #{bert_embedding.1} parent=189 // loop_header
            %s425 = sphi 0, %s429
            %p426 = scmp.ge.s32.totalorder %s425, 1
            %s430 = sphi %s415, %s415
            %s431 = sphi %s416, %s416
          $region193: #{bert_embedding.1} parent=189 // loop_header_branch
            %428 = sbr.rel (%p426) target = $region197
          $region194: #{bert_embedding.1} parent=189 // loop_body
            %v432 = vld [vmem:[%s430] sm:%s423]
            %433 = vst [vmem:[%s431] sm:%s423] %v432
          $region195: #{bert_embedding.1} parent=189 // loop_footer
            %s429 = sadd.s32 1, %s425
          $region196: #{bert_embedding.1} parent=189 // loop_footer_branch
            %424 = sbr.rel target = $region192
          $region197: #{bert_embedding.1} parent=189 // loop_exit
            _
        $region190: #{bert_embedding.1} parent=31 // pred_fallthru
          _
        // Predicated region
        $region209: #{bert_embedding.1} parent=31 // pred_check
          _
        $region210: #{bert_embedding.1} parent=31 // pred_check_branch
          %450 = sbr.rel (0) target = $region212
        $region211: #{bert_embedding.1} parent=31 // pred_region
          %451 = vsyncadd %s417, 16
        $region212: #{bert_embedding.1} parent=31 // pred_fallthru
          _
        %s452 = sadd.s32 %s220, 6
        %s453 = sld [smem:[#allocation5 + %s452]]
        %s454 = scalar_lea.vmem %s2, %s453
        %s455 = scalar_lea.vmem [#allocation2], 6
        %s456 = scalar_lea.sflag [#allocation3], 6
        // Predicated region
        $region213: #{bert_embedding.1} parent=31 // pred_check
          _
        $region214: #{bert_embedding.1} parent=31 // pred_check_branch
          %458 = sbr.rel target = $region216
        $region215: #{bert_embedding.1} parent=31 // pred_region
          // Predicated region
          $region228: #{bert_embedding.1} parent=215 // pred_check
            _
          $region229: #{bert_embedding.1} parent=215 // pred_check_branch
            %474 = sbr.rel (0) target = $region231
          $region230: #{bert_embedding.1} parent=215 // pred_region
            %s476 = ssub.s32 2, 1
            loop: start=0, step=1, limit=1
            $region232: #{bert_embedding.1} parent=230 // loop_pre_header
              _
            $region233: #{bert_embedding.1} parent=230 // loop_header
              %s478 = sphi 0, %s482
              %p479 = scmp.ge.s32.totalorder %s478, 1
              %s483 = sphi %s454, %s454
              %s484 = sphi %s455, %s455
            $region234: #{bert_embedding.1} parent=230 // loop_header_branch
              %481 = sbr.rel (%p479) target = $region238
            $region235: #{bert_embedding.1} parent=230 // loop_body
              %v485 = vld [vmem:[%s483] sm:%s476]
              %486 = vst [vmem:[%s484] sm:%s476] %v485
            $region236: #{bert_embedding.1} parent=230 // loop_footer
              %s482 = sadd.s32 1, %s478
            $region237: #{bert_embedding.1} parent=230 // loop_footer_branch
              %477 = sbr.rel target = $region233
            $region238: #{bert_embedding.1} parent=230 // loop_exit
              _
          $region231: #{bert_embedding.1} parent=215 // pred_fallthru
            _
        $region216: #{bert_embedding.1} parent=31 // pred_fallthru
          _
        // Predicated region
        $region217: #{bert_embedding.1} parent=31 // pred_check
          _
        $region218: #{bert_embedding.1} parent=31 // pred_check_branch
          %460 = sbr.rel (0) target = $region220
        $region219: #{bert_embedding.1} parent=31 // pred_region
          %s462 = ssub.s32 2, 1
          loop: start=0, step=1, limit=1
          $region221: #{bert_embedding.1} parent=219 // loop_pre_header
            _
          $region222: #{bert_embedding.1} parent=219 // loop_header
            %s464 = sphi 0, %s468
            %p465 = scmp.ge.s32.totalorder %s464, 1
            %s469 = sphi %s454, %s454
            %s470 = sphi %s455, %s455
          $region223: #{bert_embedding.1} parent=219 // loop_header_branch
            %467 = sbr.rel (%p465) target = $region227
          $region224: #{bert_embedding.1} parent=219 // loop_body
            %v471 = vld [vmem:[%s469] sm:%s462]
            %472 = vst [vmem:[%s470] sm:%s462] %v471
          $region225: #{bert_embedding.1} parent=219 // loop_footer
            %s468 = sadd.s32 1, %s464
          $region226: #{bert_embedding.1} parent=219 // loop_footer_branch
            %463 = sbr.rel target = $region222
          $region227: #{bert_embedding.1} parent=219 // loop_exit
            _
        $region220: #{bert_embedding.1} parent=31 // pred_fallthru
          _
        // Predicated region
        $region239: #{bert_embedding.1} parent=31 // pred_check
          _
        $region240: #{bert_embedding.1} parent=31 // pred_check_branch
          %489 = sbr.rel (0) target = $region242
        $region241: #{bert_embedding.1} parent=31 // pred_region
          %490 = vsyncadd %s456, 16
        $region242: #{bert_embedding.1} parent=31 // pred_fallthru
          _
        %s491 = sadd.s32 %s220, 7
        %s492 = sld [smem:[#allocation5 + %s491]]
        %s493 = scalar_lea.vmem %s2, %s492
        %s494 = scalar_lea.vmem [#allocation2], 7
        %s495 = scalar_lea.sflag [#allocation3], 7
        // Predicated region
        $region243: #{bert_embedding.1} parent=31 // pred_check
          _
        $region244: #{bert_embedding.1} parent=31 // pred_check_branch
          %497 = sbr.rel target = $region246
        $region245: #{bert_embedding.1} parent=31 // pred_region
          // Predicated region
          $region258: #{bert_embedding.1} parent=245 // pred_check
            _
          $region259: #{bert_embedding.1} parent=245 // pred_check_branch
            %513 = sbr.rel (0) target = $region261
          $region260: #{bert_embedding.1} parent=245 // pred_region
            %s515 = ssub.s32 2, 1
            loop: start=0, step=1, limit=1
            $region262: #{bert_embedding.1} parent=260 // loop_pre_header
              _
            $region263: #{bert_embedding.1} parent=260 // loop_header
              %s517 = sphi 0, %s521
              %p518 = scmp.ge.s32.totalorder %s517, 1
              %s522 = sphi %s493, %s493
              %s523 = sphi %s494, %s494
            $region264: #{bert_embedding.1} parent=260 // loop_header_branch
              %520 = sbr.rel (%p518) target = $region268
            $region265: #{bert_embedding.1} parent=260 // loop_body
              %v524 = vld [vmem:[%s522] sm:%s515]
              %525 = vst [vmem:[%s523] sm:%s515] %v524
            $region266: #{bert_embedding.1} parent=260 // loop_footer
              %s521 = sadd.s32 1, %s517
            $region267: #{bert_embedding.1} parent=260 // loop_footer_branch
              %516 = sbr.rel target = $region263
            $region268: #{bert_embedding.1} parent=260 // loop_exit
              _
          $region261: #{bert_embedding.1} parent=245 // pred_fallthru
            _
        $region246: #{bert_embedding.1} parent=31 // pred_fallthru
          _
        // Predicated region
        $region247: #{bert_embedding.1} parent=31 // pred_check
          _
        $region248: #{bert_embedding.1} parent=31 // pred_check_branch
          %499 = sbr.rel (0) target = $region250
        $region249: #{bert_embedding.1} parent=31 // pred_region
          %s501 = ssub.s32 2, 1
          loop: start=0, step=1, limit=1
          $region251: #{bert_embedding.1} parent=249 // loop_pre_header
            _
          $region252: #{bert_embedding.1} parent=249 // loop_header
            %s503 = sphi 0, %s507
            %p504 = scmp.ge.s32.totalorder %s503, 1
            %s508 = sphi %s493, %s493
            %s509 = sphi %s494, %s494
          $region253: #{bert_embedding.1} parent=249 // loop_header_branch
            %506 = sbr.rel (%p504) target = $region257
          $region254: #{bert_embedding.1} parent=249 // loop_body
            %v510 = vld [vmem:[%s508] sm:%s501]
            %511 = vst [vmem:[%s509] sm:%s501] %v510
          $region255: #{bert_embedding.1} parent=249 // loop_footer
            %s507 = sadd.s32 1, %s503
          $region256: #{bert_embedding.1} parent=249 // loop_footer_branch
            %502 = sbr.rel target = $region252
          $region257: #{bert_embedding.1} parent=249 // loop_exit
            _
        $region250: #{bert_embedding.1} parent=31 // pred_fallthru
          _
        // Predicated region
        $region269: #{bert_embedding.1} parent=31 // pred_check
          _
        $region270: #{bert_embedding.1} parent=31 // pred_check_branch
          %528 = sbr.rel (0) target = $region272
        $region271: #{bert_embedding.1} parent=31 // pred_region
          %529 = vsyncadd %s495, 16
        $region272: #{bert_embedding.1} parent=31 // pred_fallthru
          _
        loop: start=0, step=1, limit=8
        $region273: #{bert_embedding.1} parent=31 // loop_pre_header
          _
        $region274: #{bert_embedding.1} parent=31 // loop_header
          %s531 = sphi 0, %s535
          %p532 = scmp.ge.s32.totalorder %s531, 8
        $region275: #{bert_embedding.1} parent=31 // loop_header_branch
          %534 = sbr.rel (%p532) target = $region279
        $region276: #{bert_embedding.1} parent=31 // loop_body
          %s536 = sand.u32 %s531, 7
          %s537 = scalar_lea.sflag [#allocation3], %s536
          %s538 = smul.u32 1, 1
          %s539 = sshll.u32 %s538, 4
          %540 = dma.done %s537, %s539
          %s541 = sadd.s32 %s531, 8
          %p542 = scmp.lt.s32.totalorder %s541, 8
          // Predicated region
          $region280: #{bert_embedding.1} parent=276 // pred_check
            %p543 = pneg %p542
          $region281: #{bert_embedding.1} parent=276 // pred_check_branch
            %545 = sbr.rel (%p543) target = $region283
          $region282: #{bert_embedding.1} parent=276 // pred_region
            %s546 = sadd.s32 %s220, %s541
            %s547 = sld [smem:[#allocation5 + %s546]]
            %s548 = sand.u32 %s541, 7
            %s549 = scalar_lea.vmem %s2, %s547
            %s550 = scalar_lea.vmem [#allocation2], %s541
            %s551 = scalar_lea.sflag [#allocation3], %s548
            // Predicated region
            $region284: #{bert_embedding.1} parent=282 // pred_check
              _
            $region285: #{bert_embedding.1} parent=282 // pred_check_branch
              %553 = sbr.rel target = $region287
            $region286: #{bert_embedding.1} parent=282 // pred_region
              // Predicated region
              $region299: #{bert_embedding.1} parent=286 // pred_check
                _
              $region300: #{bert_embedding.1} parent=286 // pred_check_branch
                %569 = sbr.rel (0) target = $region302
              $region301: #{bert_embedding.1} parent=286 // pred_region
                %s571 = ssub.s32 2, 1
                loop: start=0, step=1, limit=1
                $region303: #{bert_embedding.1} parent=301 // loop_pre_header
                  _
                $region304: #{bert_embedding.1} parent=301 // loop_header
                  %s573 = sphi 0, %s577
                  %p574 = scmp.ge.s32.totalorder %s573, 1
                  %s578 = sphi %s549, %s549
                  %s579 = sphi %s550, %s550
                $region305: #{bert_embedding.1} parent=301 // loop_header_branch
                  %576 = sbr.rel (%p574) target = $region309
                $region306: #{bert_embedding.1} parent=301 // loop_body
                  %v580 = vld [vmem:[%s578] sm:%s571]
                  %581 = vst [vmem:[%s579] sm:%s571] %v580
                $region307: #{bert_embedding.1} parent=301 // loop_footer
                  %s577 = sadd.s32 1, %s573
                $region308: #{bert_embedding.1} parent=301 // loop_footer_branch
                  %572 = sbr.rel target = $region304
                $region309: #{bert_embedding.1} parent=301 // loop_exit
                  _
              $region302: #{bert_embedding.1} parent=286 // pred_fallthru
                _
            $region287: #{bert_embedding.1} parent=282 // pred_fallthru
              _
            // Predicated region
            $region288: #{bert_embedding.1} parent=282 // pred_check
              _
            $region289: #{bert_embedding.1} parent=282 // pred_check_branch
              %555 = sbr.rel (0) target = $region291
            $region290: #{bert_embedding.1} parent=282 // pred_region
              %s557 = ssub.s32 2, 1
              loop: start=0, step=1, limit=1
              $region292: #{bert_embedding.1} parent=290 // loop_pre_header
                _
              $region293: #{bert_embedding.1} parent=290 // loop_header
                %s559 = sphi 0, %s563
                %p560 = scmp.ge.s32.totalorder %s559, 1
                %s564 = sphi %s549, %s549
                %s565 = sphi %s550, %s550
              $region294: #{bert_embedding.1} parent=290 // loop_header_branch
                %562 = sbr.rel (%p560) target = $region298
              $region295: #{bert_embedding.1} parent=290 // loop_body
                %v566 = vld [vmem:[%s564] sm:%s557]
                %567 = vst [vmem:[%s565] sm:%s557] %v566
              $region296: #{bert_embedding.1} parent=290 // loop_footer
                %s563 = sadd.s32 1, %s559
              $region297: #{bert_embedding.1} parent=290 // loop_footer_branch
                %558 = sbr.rel target = $region293
              $region298: #{bert_embedding.1} parent=290 // loop_exit
                _
            $region291: #{bert_embedding.1} parent=282 // pred_fallthru
              _
            // Predicated region
            $region310: #{bert_embedding.1} parent=282 // pred_check
              _
            $region311: #{bert_embedding.1} parent=282 // pred_check_branch
              %584 = sbr.rel (0) target = $region313
            $region312: #{bert_embedding.1} parent=282 // pred_region
              %585 = vsyncadd %s551, 16
            $region313: #{bert_embedding.1} parent=282 // pred_fallthru
              _
          $region283: #{bert_embedding.1} parent=276 // pred_fallthru
            _
        $region277: #{bert_embedding.1} parent=31 // loop_footer
          %s535 = sadd.s32 1, %s531
        $region278: #{bert_embedding.1} parent=31 // loop_footer_branch
          %530 = sbr.rel target = $region274
        $region279: #{bert_embedding.1} parent=31 // loop_exit
          _
        %v586 = vld [vmem:[%s213] sm:$0xff]
        %v587 = vld [vmem:[%s3] sm:$0x1]
        %v588 = vld [vmem:[%s3 + $0x1] sm:$0x1]
        %v589 = vld [vmem:[%s3 + $0x2] sm:$0x1]
        %vm590 = vcmp.eq.s32.totalorder %v586, 1
        %vm591 = vcmp.eq.s32.totalorder %v586, 2
        %v592 = vsel %vm591, 1, 0
        %593 = vset.pattern.permute.xlu0 0
        %594 = vperm.xlu0 %593, %v592
        %v595 = vpop.permute.xlu0 %594
        %vm596 = vcmp.eq.s32.totalorder %v595, 1
        %v597 = vperm.slane %v589, 0
        %v598 = vperm.slane %v587, 0
        %v599 = vsel %vm596, %v597, %v598
        %v600 = vsel %vm590, 1, 0
        %601 = vset.pattern.permute.xlu0 0
        %602 = vperm.xlu0 %601, %v600
        %v603 = vpop.permute.xlu0 %602
        %vm604 = vcmp.eq.s32.totalorder %v603, 1
        %v605 = vperm.slane %v588, 0
        %v606 = vsel %vm604, %v605, %v599
        %v607 = vld [vmem:[#allocation2] sm:$0xff]
        %v608 = vld [vmem:[%s217] sm:$0xff]
        %v609 = vadd.f32 %v607, %v608
        %v610 = vadd.f32 %v609, %v606
        %611 = vst [vmem:[%s206] sm:$0xff] %v610
        %s612 = sand.u32 %s124, 1
        %s613 = scalar_lea.sflag [#allocation7], %s612
        %s614 = sand.u32 %s124, 1
        %s615 = smul.addr %s614, 8
        %s616 = scalar_lea.vmem [#allocation6], %s615
        // Predicated region
        $region314: #{bert_embedding.1} parent=31 // pred_check
          %p617 = pneg %p134
        $region315: #{bert_embedding.1} parent=31 // pred_check_branch
          %619 = sbr.rel (%p617) target = $region317
        $region316: #{bert_embedding.1} parent=31 // pred_region
          %621 = vsyncadd %s613, 0
          %s622 = sadd.s32 %s32, %s31
          %s623 = smul.addr %s622, 8
          %s624 = scalar_lea.hbm %s5, %s623
          %s626 = sshll.u32 %s616, 4
          %s627 = int_to_ptr.vmem [resolvable:$true] %s626
          %s628 = sshll.u32 %s624, 4
          %s629 = int_to_ptr.hbm [resolvable:$true] %s628
          %631 = dma.vmem_to_hbm [thread:$0]  %s627, 128, %s629, %s613
        $region317: #{bert_embedding.1} parent=31 // pred_fallthru
          _
      $region32: #{bert_embedding.1} parent=5 // pred_fallthru
        _
      %p632 = scmp.le.s32.totalorder 2, %s22
      // Predicated region
      $region318: #{bert_embedding.1} parent=5 // pred_check
        %p633 = pneg %p632
      $region319: #{bert_embedding.1} parent=5 // pred_check_branch
        %635 = sbr.rel (%p633) target = $region321
      $region320: #{bert_embedding.1} parent=5 // pred_region
        %s636 = ssub.s32 %s22, 2
        // Predicated region
        $region322: #{bert_embedding.1} parent=320 // pred_check
          %p637 = pneg %p140
        $region323: #{bert_embedding.1} parent=320 // pred_check_branch
          %639 = sbr.rel (%p637) target = $region325
        $region324: #{bert_embedding.1} parent=320 // pred_region
          %s640 = sand.u32 %s125, 1
          %s641 = scalar_lea.sflag [#allocation7], %s640
          %s642 = sand.u32 %s125, 1
          %s643 = smul.addr %s642, 8
          %s644 = scalar_lea.vmem [#allocation6], %s643
          %646 = dma.done %s641, 128
        $region325: #{bert_embedding.1} parent=320 // pred_fallthru
          _
      $region321: #{bert_embedding.1} parent=5 // pred_fallthru
        _
    $region6: #{bert_embedding.1} parent=1 // loop_footer
      %s26 = sadd.s32 1, %s22
    $region7: #{bert_embedding.1} parent=1 // loop_footer_branch
      %21 = sbr.rel target = $region3
    $region8: #{bert_embedding.1} parent=1 // loop_exit
      _
    %647 = vsyncpa [#allocation7], 1
    %s648 = scalar_lea.sflag [#allocation7], 1
    %649 = vsyncpa %s648, 1
  %650 = vsyncmov [#allocation3]
  %s651 = vpop.sfrf %650
  %p652 = scmp.eq.s32.totalorder %s651, 0
  %p653 = pneg %p652
  %655 = shalt.err (%p653)
  %s656 = scalar_lea.sflag [#allocation3], 1
  %657 = vsyncmov %s656
  %s658 = vpop.sfrf %657
  %p659 = scmp.eq.s32.totalorder %s658, 0
  %p660 = pneg %p659
  %662 = shalt.err (%p660)
  %s663 = scalar_lea.sflag [#allocation3], 2
  %664 = vsyncmov %s663
  %s665 = vpop.sfrf %664
  %p666 = scmp.eq.s32.totalorder %s665, 0
  %p667 = pneg %p666
  %669 = shalt.err (%p667)
  %s670 = scalar_lea.sflag [#allocation3], 3
  %671 = vsyncmov %s670
  %s672 = vpop.sfrf %671
  %p673 = scmp.eq.s32.totalorder %s672, 0
  %p674 = pneg %p673
  %676 = shalt.err (%p674)
  %s677 = scalar_lea.sflag [#allocation3], 4
  %678 = vsyncmov %s677
  %s679 = vpop.sfrf %678
  %p680 = scmp.eq.s32.totalorder %s679, 0
  %p681 = pneg %p680
  %683 = shalt.err (%p681)
  %s684 = scalar_lea.sflag [#allocation3], 5
  %685 = vsyncmov %s684
  %s686 = vpop.sfrf %685
  %p687 = scmp.eq.s32.totalorder %s686, 0
  %p688 = pneg %p687
  %690 = shalt.err (%p688)
  %s691 = scalar_lea.sflag [#allocation3], 6
  %692 = vsyncmov %s691
  %s693 = vpop.sfrf %692
  %p694 = scmp.eq.s32.totalorder %s693, 0
  %p695 = pneg %p694
  %697 = shalt.err (%p695)
  %s698 = scalar_lea.sflag [#allocation3], 7
  %699 = vsyncmov %s698
  %s700 = vpop.sfrf %699
  %p701 = scmp.eq.s32.totalorder %s700, 0
  %p702 = pneg %p701
  %704 = shalt.err (%p702)

</llo_original>
